<compile_context>
chip_gen: v7x
topology: tpu7x:2x2x1
jax: 0.10.0
libtpu: 0.0.40
codegen_flags: <defaults>
</compile_context>

<pallas_src>
import functools

import jax
import jax.numpy as jnp
from jax.experimental import pallas as pl
from jax.experimental.pallas import tpu as pltpu


def _time2vec_kernel(x_ref, w_ref, b_ref, o_ref, *, linear_shape, use_vpu_mac):
    x = x_ref[...].astype(jnp.float32)      # [TB, K]
    w = w_ref[...].astype(jnp.float32)      # [K, OUT]
    b = b_ref[...].astype(jnp.float32)      # [1, OUT]

    if use_vpu_mac:
        # K in {1, 2}: unrolled multiply-accumulate on the VPU (MXU would be
        # almost entirely idle).  For K >= 3 we use the MXU below so the VALU
        # never becomes the binding VLIW slot on v6e/v7x.
        y = jnp.broadcast_to(b, (x.shape[0], w.shape[1]))
        for k in range(x.shape[1]):
            y = y + x[:, k:k + 1] * w[k:k + 1, :]
    else:
        y = jnp.dot(x, w, preferred_element_type=jnp.float32) + b

    out_cols = y.shape[1]
    if linear_shape == 0:
        # No linear head: everything goes through sin.
        y = jnp.sin(y)
    elif linear_shape < out_cols:
        # Masked sin boundary directly at column `linear_shape` (no padding,
        # no second HBM pass in the wrapper).  EUP/VPU have plenty of slack
        # in this mem-bound kernel, so computing sin on all columns and
        # selecting is effectively free.
        col = jax.lax.broadcasted_iota(jnp.int32, y.shape, 1)
        y = jnp.where(col >= linear_shape, jnp.sin(y), y)
    # else: degenerate pure-linear head, no sin at all.

    o_ref[...] = y.astype(o_ref.dtype)


def prepare_time2vec_params(w0, b0, w1, b1, dtype=jnp.float32):
    """Fuse the per-head weights ONCE (hoisted out of the hot path).

    w0: [linear_shape, in], b0: [linear_shape]
    w1: [sine_shape,   in], b1: [sine_shape]
    Returns (w_fused [in, out_shape], b_fused [1, out_shape], meta dict).
    No lane padding: the kernel emits the PyTorch layout directly.
    """
    linear_shape, in_shape = w0.shape
    sine_shape = w1.shape[0]
    w = jnp.concatenate([w0.T.astype(dtype), w1.T.astype(dtype)], axis=1)
    b = jnp.concatenate([b0.astype(dtype), b1.astype(dtype)], axis=0)[None, :]
    meta = dict(in_shape=in_shape, linear_shape=linear_shape,
                sine_shape=sine_shape, out_shape=linear_shape + sine_shape)
    return w, b, meta


def _vmem_limit_bytes():
    """Scoped VMEM limit derived from the chip's physical VMEM.

    <= ~48 MiB on v7x (64 MiB physical per TC), up to 96 MiB on v5e/v6e
    (128 MiB physical).  Falls back to a conservative 48 MiB if the query
    is unavailable.
    """
    try:
        cap = int(getattr(pltpu.get_tpu_info(), "vmem_capacity_bytes"))
    except Exception:
        cap = 64 * 1024 * 1024
    return max(16 * 1024 * 1024, min((cap * 3) // 4, 96 * 1024 * 1024))


def _pick_block_rows(B, in_shape, out_shape, requested, bytes_per_elt, sublane,
                     vmem_limit):
    """Largest row tile that (a) keeps double-buffered x/out tiles under a
    VMEM budget and (b) leaves >= 2 grid steps when B is big enough so the
    'parallel' batch axis can shard across both v7x TensorCores."""
    tile_budget = vmem_limit // 2            # headroom for w/b + bookkeeping
    per_row = 2 * (in_shape + out_shape) * bytes_per_elt   # 2x: double buffer
    max_rows = max(sublane, (tile_budget // per_row) // sublane * sublane)
    tb = min(requested, max_rows)
    if B >= 2 * sublane:
        half = -(-B // 2)                              # ceil(B / 2)
        half = -(-half // sublane) * sublane           # round up to sublane
        tb = min(tb, half)
    if tb >= B:
        return B        # whole batch in one block (equals full array dim)
    return max(sublane, (tb // sublane) * sublane)


def time2vec_forward(x, w_fused, b_fused, meta, *, block_rows=2048,
                     vpu_mac_max_k=2):
    """x: [B, in] or [B, in, 1]; w_fused/b_fused/meta from prepare_time2vec_params.

    Returns [B, out_shape] directly (PyTorch layout) — no de-padding epilogue.
    """
    if x.ndim == 3:
        x = jnp.squeeze(x, axis=2)
    B, in_shape = x.shape
    assert in_shape == meta["in_shape"]
    out_shape = meta["out_shape"]
    linear_shape = meta["linear_shape"]

    itemsize = jnp.dtype(x.dtype).itemsize
    sublane = max(8, 32 // itemsize)         # 8 for f32, 16 for bf16
    vmem_limit = _vmem_limit_bytes()
    tb = _pick_block_rows(B, in_shape, out_shape, block_rows, itemsize,
                          sublane, vmem_limit)
    grid = (pl.cdiv(B, tb),)

    kernel = functools.partial(
        _time2vec_kernel,
        linear_shape=linear_shape,
        use_vpu_mac=(in_shape <= vpu_mac_max_k),
    )

    w_itemsize = jnp.dtype(w_fused.dtype).itemsize
    cost = pl.CostEstimate(
        flops=2 * B * in_shape * out_shape,
        transcendentals=B * meta["sine_shape"],
        bytes_accessed=itemsize * B * (in_shape + out_shape)
        + w_itemsize * (in_shape + 1) * out_shape,
    )

    return pl.pallas_call(
        kernel,
        out_shape=jax.ShapeDtypeStruct((B, out_shape), x.dtype),
        grid=grid,
        in_specs=[
            pl.BlockSpec((tb, in_shape), lambda i: (i, 0)),          # batch-tiled
            pl.BlockSpec((in_shape, out_shape), lambda i: (0, 0)),   # resident
            pl.BlockSpec((1, out_shape), lambda i: (0, 0)),          # resident
        ],
        out_specs=pl.BlockSpec((tb, out_shape), lambda i: (i, 0)),
        compiler_params=pltpu.CompilerParams(
            dimension_semantics=("parallel",),
            vmem_limit_bytes=vmem_limit,
        ),
        cost_estimate=cost,
    )(x, w_fused, b_fused)


def init_time2vec_params(key, in_shape, out_shape):
    """Deterministic init mirroring nn.Linear's U(-1/sqrt(in), 1/sqrt(in))."""
    linear_shape = out_shape // 4
    sine_shape = out_shape - linear_shape
    k0, k1, k2, k3 = jax.random.split(key, 4)
    bound = 1.0 / jnp.sqrt(jnp.float32(in_shape))
    w0 = jax.random.uniform(k0, (linear_shape, in_shape), jnp.float32, -bound, bound)
    b0 = jax.random.uniform(k1, (linear_shape,), jnp.float32, -bound, bound)
    w1 = jax.random.uniform(k2, (sine_shape, in_shape), jnp.float32, -bound, bound)
    b1 = jax.random.uniform(k3, (sine_shape,), jnp.float32, -bound, bound)
    return w0, b0, w1, b1


if __name__ == "__main__":
    key = jax.random.PRNGKey(0)
    in_shape, out_shape, batch = 8, 32, 64

    kx, kp = jax.random.split(key)
    x = jax.random.normal(kx, (batch, in_shape), jnp.float32)
    w0, b0, w1, b1 = init_time2vec_params(kp, in_shape, out_shape)

    # Weight fusion done once, outside the per-call hot path.
    w_fused, b_fused, meta = prepare_time2vec_params(w0, b0, w1, b1)

    # batch=64 -> TB capped at 32 -> 2 grid steps (exercises the batch-tiled,
    # dual-TC-friendly path).
    out = time2vec_forward(x, w_fused, b_fused, meta)
    out = jax.block_until_ready(out)

    # Reference check in plain JAX (same math as the PyTorch forward).
    te_lin = x @ w0.T + b0
    te_sin = jnp.sin(x @ w1.T + b1)
    ref = jnp.concatenate([te_lin, te_sin], axis=1)
    assert out.shape == (batch, out_shape)
    assert jnp.allclose(out, ref, atol=1e-5, rtol=1e-5)

    print("KERNEL_OK")
</pallas_src>

<mosaic_0001>
module attributes {stable_mosaic.version = 11 : i64} {
  func.func @_time2vec_kernel(%arg0: i32, %arg1: memref<32x8xf32, #tpu.memory_space<vmem>>, %arg2: memref<8x32xf32, #tpu.memory_space<vmem>>, %arg3: memref<1x32xf32, #tpu.memory_space<vmem>>, %arg4: memref<32x32xf32, #tpu.memory_space<vmem>>) attributes {dimension_semantics = [#tpu.dimension_semantics<parallel>], iteration_bounds = array<i64: 2>, scalar_prefetch = 0 : i64, scratch_operands = 0 : i64, tpu.core_type = #tpu.core_type<tc>, window_params = [{transform_indices = @transform_0, window_bounds = array<i64: 32, 8>}, {pipeline_mode = #tpu.pipeline_mode<synchronous>, transform_indices = @transform_1, window_bounds = array<i64: 8, 32>}, {pipeline_mode = #tpu.pipeline_mode<synchronous>, transform_indices = @transform_2, window_bounds = array<i64: 1, 32>}, {transform_indices = @transform_3, window_bounds = array<i64: 32, 32>}]} {
    %c0 = arith.constant 0 : index
    %c0_0 = arith.constant 0 : index
    %0 = vector.load %arg1[%c0, %c0_0] : memref<32x8xf32, #tpu.memory_space<vmem>>, vector<32x8xf32>
    %c0_1 = arith.constant 0 : index
    %c0_2 = arith.constant 0 : index
    %1 = vector.load %arg2[%c0_1, %c0_2] : memref<8x32xf32, #tpu.memory_space<vmem>>, vector<8x32xf32>
    %c0_3 = arith.constant 0 : index
    %c0_4 = arith.constant 0 : index
    %2 = vector.load %arg3[%c0_3, %c0_4] : memref<1x32xf32, #tpu.memory_space<vmem>>, vector<1x32xf32>
    %cst = arith.constant dense<0.000000e+00> : vector<32x32xf32>
    %3 = tpu.matmul %0, %1, %cst {dimension_numbers = #tpu.dot_dimension_numbers<[1], [0], [0], [1], [0, 0, 1, 1], [], []>} : vector<32x8xf32>, vector<8x32xf32>, vector<32x32xf32> -> vector<32x32xf32>
    %4 = vector.broadcast %2 : vector<1x32xf32> to vector<32x32xf32>
    %5 = arith.addf %3, %4 : vector<32x32xf32>
    %6 = tpu.iota {dimensions = array<i32: 1>} : vector<32x32xi32>
    %c8_i32 = arith.constant 8 : i32
    %7 = vector.broadcast %c8_i32 : i32 to vector<32x32xi32>
    %8 = arith.cmpi sge, %6, %7 : vector<32x32xi32>
    %9 = math.sin %5 : vector<32x32xf32>
    %10 = arith.select %8, %9, %5 : vector<32x32xi1>, vector<32x32xf32>
    %c0_5 = arith.constant 0 : index
    %c0_6 = arith.constant 0 : index
    %11 = vector.load %arg4[%c0_5, %c0_6] : memref<32x32xf32, #tpu.memory_space<vmem>>, vector<32x32xf32>
    tpu.vector_store %arg4[%c0_5, %c0_6], %10 {strides = array<i32>} : memref<32x32xf32, #tpu.memory_space<vmem>>, vector<32x32xf32>,
    return
  }
  func.func @transform_0(%arg0: i32) -> (i32, i32) {
    %c0_i32 = arith.constant 0 : i32
    %c0_i32_0 = arith.constant 0 : i32
    return %arg0, %c0_i32 : i32, i32
  }
  func.func @transform_1(%arg0: i32) -> (i32, i32) {
    %c0_i32 = arith.constant 0 : i32
    %c0_i32_0 = arith.constant 0 : i32
    %c0_i32_1 = arith.constant 0 : i32
    return %c0_i32, %c0_i32_0 : i32, i32
  }
  func.func @transform_2(%arg0: i32) -> (i32, i32) {
    %c0_i32 = arith.constant 0 : i32
    %c0_i32_0 = arith.constant 0 : i32
    %c0_i32_1 = arith.constant 0 : i32
    return %c0_i32, %c0_i32_0 : i32, i32
  }
  func.func @transform_3(%arg0: i32) -> (i32, i32) {
    %c0_i32 = arith.constant 0 : i32
    %c0_i32_0 = arith.constant 0 : i32
    return %arg0, %c0_i32 : i32, i32
  }
}

</mosaic_0001>

<llo_original>
// kernel: tpu_custom_call.1
$region0: #{tpu_custom_call.1}
  #allocation0 [shape = 'u32[]', space=smem, size = 0x4, offset = 0x4, fixed_abs, tag = 'smem constant byte address 0x4 - core index']
  #allocation1 [shape = 'u32[144,128]{1,0:T(1,128)}', space=vmem, size = 0x12000, scoped, tag = 'internal scratch']
  %s0 = inlined_call_operand.vmem [shape: f32[64,8], index: 0, kind: input, shape index: {}]
  %s1 = inlined_call_operand.vmem [shape: f32[8,32], index: 1, kind: input, shape index: {}]
  %s2 = inlined_call_operand.vmem [shape: f32[1,32], index: 2, kind: input, shape index: {}]
  %s3 = inlined_call_operand.vmem [shape: f32[64,32], index: 3, kind: output, shape index: {}]
  %s4 = sld [smem:[#allocation0]]
  $region45: #{tpu_custom_call.1} parent=0
    _
  %s6 = ssub.s32 1, %s4
  %s7 = scalar_select 0, %s6, %s4
  loop: start=0, step=1, limit=4
  $region2: #{tpu_custom_call.1} parent=0 // loop_pre_header
    _
  $region3: #{tpu_custom_call.1} parent=0 // loop_header
    %s9 = sphi 0, %s13
    %p10 = scmp.ge.s32.totalorder %s9, 4
    %s19 = sphi 0, %s21
    %s22 = sphi 0, %s19
    %s23 = sphi 0, %s22
    %s39 = sphi 0, %s23
    %s43 = sphi 0, %s43
    %s45 = sphi 0, %s43
    %s46 = sphi 0, %s45
    %s60 = sphi 0, %s46
    %s64 = sphi 0, %s64
    %s66 = sphi 0, %s64
    %s67 = sphi 0, %s66
    %s81 = sphi 0, %s67
    %s87 = sphi 0, %s89
    %s90 = sphi 0, %s87
    %s91 = sphi 0, %s90
    %s107 = sphi 0, %s91
  $region4: #{tpu_custom_call.1} parent=0 // loop_header_branch
    %12 = sbr.rel (%p10) target = $region8
  $region5: #{tpu_custom_call.1} parent=0 // loop_body
    %s14 = ssub.s32 %s9, 1
    %s15 = ssub.s32 %s9, 2
    %s16 = sadd.s32 %s9, 1
    %s17 = ssub.s32 %s9, %s16
    %p18 = scmp.eq.s32.totalorder %s17, 0
    %s20 = sadd.s32 %s19, 1
    %s21 = scalar_select %p18, %s19, %s20
    %p24 = pneg %p18
    %p25 = scmp.eq.s32.totalorder %s9, 1
    %p26 = por %p24, %p25
    %p27 = scmp.ne.s32.totalorder %s19, %s22
    %p28 = scmp.eq.s32.totalorder %s9, 0
    %p29 = por %p27, %p28
    %p30 = scmp.ne.s32.totalorder %s19, %s22
    %p31 = scmp.eq.s32.totalorder %s14, 1
    %p32 = por %p30, %p31
    %p33 = scmp.ne.s32.totalorder %s22, %s23
    %p34 = scmp.eq.s32.totalorder %s14, 0
    %p35 = por %p33, %p34
    %p36 = scmp.ne.s32.totalorder %s22, %s23
    %p37 = scmp.eq.s32.totalorder %s15, 1
    %p38 = por %p36, %p37
    %p40 = scmp.ne.s32.totalorder %s23, %s39
    %p41 = scmp.eq.s32.totalorder %s15, 0
    %p42 = por %p40, %p41
    %s44 = sadd.s32 %s43, 1
    %p47 = scmp.eq.s32.totalorder %s9, 1
    %p48 = scmp.ne.s32.totalorder %s43, %s45
    %p49 = scmp.eq.s32.totalorder %s9, 0
    %p50 = por %p48, %p49
    %p51 = scmp.ne.s32.totalorder %s43, %s45
    %p52 = scmp.eq.s32.totalorder %s14, 1
    %p53 = por %p51, %p52
    %p54 = scmp.ne.s32.totalorder %s45, %s46
    %p55 = scmp.eq.s32.totalorder %s14, 0
    %p56 = por %p54, %p55
    %p57 = scmp.ne.s32.totalorder %s45, %s46
    %p58 = scmp.eq.s32.totalorder %s15, 1
    %p59 = por %p57, %p58
    %p61 = scmp.ne.s32.totalorder %s46, %s60
    %p62 = scmp.eq.s32.totalorder %s15, 0
    %p63 = por %p61, %p62
    %s65 = sadd.s32 %s64, 1
    %p68 = scmp.eq.s32.totalorder %s9, 1
    %p69 = scmp.ne.s32.totalorder %s64, %s66
    %p70 = scmp.eq.s32.totalorder %s9, 0
    %p71 = por %p69, %p70
    %p72 = scmp.ne.s32.totalorder %s64, %s66
    %p73 = scmp.eq.s32.totalorder %s14, 1
    %p74 = por %p72, %p73
    %p75 = scmp.ne.s32.totalorder %s66, %s67
    %p76 = scmp.eq.s32.totalorder %s14, 0
    %p77 = por %p75, %p76
    %p78 = scmp.ne.s32.totalorder %s66, %s67
    %p79 = scmp.eq.s32.totalorder %s15, 1
    %p80 = por %p78, %p79
    %p82 = scmp.ne.s32.totalorder %s67, %s81
    %p83 = scmp.eq.s32.totalorder %s15, 0
    %p84 = por %p82, %p83
    %s85 = ssub.s32 %s9, %s16
    %p86 = scmp.eq.s32.totalorder %s85, 0
    %s88 = sadd.s32 %s87, 1
    %s89 = scalar_select %p86, %s87, %s88
    %p92 = pneg %p86
    %p93 = scmp.eq.s32.totalorder %s9, 1
    %p94 = por %p92, %p93
    %p95 = scmp.ne.s32.totalorder %s87, %s90
    %p96 = scmp.eq.s32.totalorder %s9, 0
    %p97 = por %p95, %p96
    %p98 = scmp.ne.s32.totalorder %s87, %s90
    %p99 = scmp.eq.s32.totalorder %s14, 1
    %p100 = por %p98, %p99
    %p101 = scmp.ne.s32.totalorder %s90, %s91
    %p102 = scmp.eq.s32.totalorder %s14, 0
    %p103 = por %p101, %p102
    %p104 = scmp.ne.s32.totalorder %s90, %s91
    %p105 = scmp.eq.s32.totalorder %s15, 1
    %p106 = por %p104, %p105
    %p108 = scmp.ne.s32.totalorder %s91, %s107
    %p109 = scmp.eq.s32.totalorder %s15, 0
    %p110 = por %p108, %p109
    %p111 = scmp.le.s32.totalorder 1, %s9
    %p112 = scmp.lt.s32.totalorder %s9, 3
    %p113 = pnand %p111, %p112
    %p114 = pneg %p113
    // Predicated region
    $region9: #{tpu_custom_call.1} parent=5 // pred_check
      _
    $region10: #{tpu_custom_call.1} parent=5 // pred_check_branch
      %116 = sbr.rel (%p113) target = $region12
    $region11: #{tpu_custom_call.1} parent=5 // pred_region
      %s117 = ssub.s32 %s9, 1
      // Predicated region
      $region13: #{tpu_custom_call.1} parent=11 // pred_check
        %p118 = pneg %p56
      $region14: #{tpu_custom_call.1} parent=11 // pred_check_branch
        %120 = sbr.rel (%p118) target = $region16
      $region15: #{tpu_custom_call.1} parent=11 // pred_region
        _
      $region16: #{tpu_custom_call.1} parent=11 // pred_fallthru
        _
      // Predicated region
      $region17: #{tpu_custom_call.1} parent=11 // pred_check
        %p121 = pneg %p77
      $region18: #{tpu_custom_call.1} parent=11 // pred_check_branch
        %123 = sbr.rel (%p121) target = $region20
      $region19: #{tpu_custom_call.1} parent=11 // pred_region
        _
      $region20: #{tpu_custom_call.1} parent=11 // pred_fallthru
        _
    $region12: #{tpu_custom_call.1} parent=5 // pred_fallthru
      _
    %p124 = scmp.lt.s32.totalorder %s9, 2
    // Predicated region
    $region21: #{tpu_custom_call.1} parent=5 // pred_check
      %p125 = pneg %p124
    $region22: #{tpu_custom_call.1} parent=5 // pred_check_branch
      %127 = sbr.rel (%p125) target = $region24
    $region23: #{tpu_custom_call.1} parent=5 // pred_region
      // Predicated region
      $region25: #{tpu_custom_call.1} parent=23 // pred_check
        %p128 = pneg %p29
      $region26: #{tpu_custom_call.1} parent=23 // pred_check_branch
        %130 = sbr.rel (%p128) target = $region28
      $region27: #{tpu_custom_call.1} parent=23 // pred_region
        %s131 = smul.u32 4, %s9
        %p132 = scmp.lt.s32.totalorder %s131, 7
        %s133 = scalar_select %p132, %s131, 7
        %s134 = smul.addr %s133, 8
        %s135 = scalar_lea.vmem %s0, %s134
        %s136 = smul.u32 4, %s9
      $region28: #{tpu_custom_call.1} parent=23 // pred_fallthru
        _
    $region24: #{tpu_custom_call.1} parent=5 // pred_fallthru
      _
    %p137 = scmp.le.s32.totalorder 1, %s9
    %p138 = scmp.lt.s32.totalorder %s9, 3
    %p139 = pnand %p137, %p138
    %p140 = pneg %p139
    // Predicated region
    $region29: #{tpu_custom_call.1} parent=5 // pred_check
      _
    $region30: #{tpu_custom_call.1} parent=5 // pred_check_branch
      %142 = sbr.rel (%p139) target = $region32
    $region31: #{tpu_custom_call.1} parent=5 // pred_region
      %s143 = ssub.s32 %s9, 1
      %s144 = smul.u32 4, %s14
      %p145 = scmp.lt.s32.totalorder %s144, 7
      %s146 = scalar_select %p145, %s144, 7
      %s147 = smul.addr %s146, 8
      %s148 = scalar_lea.vmem %s0, %s147
      %p149 = pneg %p35
      %p150 = pneg %p32
      %p151 = pneg %p56
      %p152 = pneg %p53
      %p153 = pneg %p77
      %p154 = pneg %p74
      %p155 = pneg %p103
      %p156 = pneg %p100
      %s157 = smul.u32 4, %s14
      %p158 = scmp.lt.s32.totalorder %s157, 7
      %s159 = scalar_select %p158, %s157, 7
      %s160 = smul.addr %s159, 8
      %s161 = scalar_lea.vmem %s3, %s160
      %s162 = smul.u32 4, %s14
      %p163 = scmp.lt.s32.totalorder %s162, 7
      %s164 = scalar_select %p163, %s162, 7
      %s165 = smul.addr %s164, 8
      %s166 = scalar_lea.vmem %s0, %s165
      %s167 = smul.u32 4, %s14
      %s168 = smul.u32 4, %s14
      %p169 = scmp.lt.s32.totalorder %s168, 7
      %s170 = scalar_select %p169, %s168, 7
      %s171 = smul.addr %s170, 8
      %s172 = scalar_lea.vmem %s3, %s171
      %s173 = smul.u32 4, %s14
      %v174 = vld [vmem:[%s166] sm:$0xff]
      %v175 = vld [vmem:[%s166 + $0x8] sm:$0xff]
      %v176 = vld [vmem:[%s166 + $0x10] sm:$0xff]
      %v177 = vld [vmem:[%s166 + $0x18] sm:$0xff]
      %v178 = vld [vmem:[%s1] sm:$0xff]
      %v179 = vld [vmem:[%s2] sm:$0x1]
      %v181 = vlaneseq
      %v182 = vshrl.u32 %v181, 7
      %v183 = vsub.s32 0, %v182
      %v184 = vrot.slane %v179, %v183
      %vm186 = vcmask 64512
      %v188 = vsel %vm186, %v174, 0
      %v191 = vsel %vm186, %v175, 0
      %v194 = vsel %vm186, %v176, 0
      %v197 = vsel %vm186, %v177, 0
      %199 = vmatprep.subr.mxu0 0.0
      %200 = vmatpush1.msra.mxu0 %v178
      %201 = vmatprep.subr.mxu0 0.0
      %202 = vmatpush1.msra.mxu0 0.0
      %203 = vmatprep.subr.mxu0 0.0
      %204 = vmatpush1.msra.mxu0 0.0
      %205 = vmatprep.subr.mxu0 0.0
      %206 = vmatpush1.msra.mxu0 0.0
      %207 = vmatprep.subr.mxu0 0.0
      %208 = vmatpush1.msra.mxu0 0.0
      %209 = vmatprep.subr.mxu0 0.0
      %210 = vmatpush1.msra.mxu0 0.0
      %211 = vmatprep.subr.mxu0 0.0
      %212 = vmatpush1.msra.mxu0 0.0
      %213 = vmatprep.subr.mxu0 0.0
      %214 = vmatpush1.msra.mxu0 0.0
      %215 = vmatprep.subr.mxu0 0.0
      %216 = vmatpush1.msra.mxu0 0.0
      %217 = vmatprep.subr.mxu0 0.0
      %218 = vmatpush1.msra.mxu0 0.0
      %219 = vmatprep.subr.mxu0 0.0
      %220 = vmatpush1.msra.mxu0 0.0
      %221 = vmatprep.subr.mxu0 0.0
      %222 = vmatpush1.msra.mxu0 0.0
      %223 = vmatprep.subr.mxu0 0.0
      %224 = vmatpush1.msra.mxu0 0.0
      %225 = vmatprep.subr.mxu0 0.0
      %226 = vmatpush1.msra.mxu0 0.0
      %227 = vmatprep.subr.mxu0 0.0
      %228 = vmatpush1.msra.mxu0 0.0
      %229 = vmatprep.subr.mxu0 0.0
      %230 = vmatpush1.msra.mxu0 0.0
      %231 = vmatprep.subr.mxu0 0.0
      %232 = vmatpush1.msra.mxu0 0.0
      %233 = vmatprep.subr.mxu0 0.0
      %234 = vmatpush1.msra.mxu0 0.0
      %235 = vmatprep.subr.mxu0 0.0
      %236 = vmatpush1.msra.mxu0 0.0
      %237 = vmatprep.subr.mxu0 0.0
      %238 = vmatpush1.msra.mxu0 0.0
      %239 = vmatprep.subr.mxu0 0.0
      %240 = vmatpush1.msra.mxu0 0.0
      %241 = vmatprep.subr.mxu0 0.0
      %242 = vmatpush1.msra.mxu0 0.0
      %243 = vmatprep.subr.mxu0 0.0
      %244 = vmatpush1.msra.mxu0 0.0
      %245 = vmatprep.subr.mxu0 0.0
      %246 = vmatpush1.msra.mxu0 0.0
      %247 = vmatprep.subr.mxu0 0.0
      %248 = vmatpush1.msra.mxu0 0.0
      %249 = vmatprep.subr.mxu0 0.0
      %250 = vmatpush1.msra.mxu0 0.0
      %251 = vmatprep.subr.mxu0 0.0
      %252 = vmatpush1.msra.mxu0 0.0
      %253 = vmatprep.subr.mxu0 0.0
      %254 = vmatpush1.msra.mxu0 0.0
      %255 = vmatprep.subr.mxu0 0.0
      %256 = vmatpush1.msra.mxu0 0.0
      %257 = vmatprep.subr.mxu0 0.0
      %258 = vmatpush1.msra.mxu0 0.0
      %259 = vmatprep.subr.mxu0 0.0
      %260 = vmatpush1.msra.mxu0 0.0
      %261 = vmatprep.subr.mxu0 0.0
      %262 = vmatpush1.msra.mxu0 0.0
      %263 = vmatprep.mubr.f32.mxu0 0.0
      %264 = vmatmul.mubr.f32.gmra.mrb[0].mxu0 %v188
      %v265 = vpop.f32.mrb[0].mxu0
      %v266 = vadd.f32 %v184, %v265
      %v267 = vpop.f32.mrb[0].mxu0
      %268 = vmatprep.mubr.f32.mxu0 0.0
      %269 = vmatmul.mubr.f32.gmra.mrb[0].mxu0 %v191
      %v270 = vpop.f32.mrb[0].mxu0
      %v271 = vadd.f32 %v184, %v270
      %v272 = vpop.f32.mrb[0].mxu0
      %273 = vmatprep.mubr.f32.mxu0 0.0
      %274 = vmatmul.mubr.f32.gmra.mrb[0].mxu0 %v194
      %v275 = vpop.f32.mrb[0].mxu0
      %v276 = vadd.f32 %v184, %v275
      %v277 = vpop.f32.mrb[0].mxu0
      %278 = vmatprep.mubr.f32.mxu0 0.0
      %279 = vmatmul.mubr.f32.gmra.mrb[0].mxu0 %v197
      %v280 = vpop.f32.mrb[0].mxu0
      %v281 = vadd.f32 %v184, %v280
      %v282 = vpop.f32.mrb[0].mxu0
      %283 = vdwg.mxu0
      %v284 = vlaneseq
      %v285 = vand.u32 %v284, 127
      %vm286 = vcmp.ge.s32.totalorder %v285, 8
      %v287 = vand.u32 2147483647, %v266
      %vm288 = vcmp.le.f32.partialorder %v287, 0.7853982
      %vm289 = vcmp.lt.s32.totalorder %v266, 0
      %v290 = vand.u32 %v266, 2139095040
      %v291 = vshrl.u32 %v290, 23
      %v292 = vsub.s32 %v291, 127
      %v293 = vand.u32 2147483647, %v266
      %v294 = vand.u32 %v293, 8388607
      %v295 = vor.u32 %v294, 8388608
      %v296 = vsub.s32 0, %v295
      %v297 = vadd.s32 %v292, 1
      %vm298 = vcmp.gt.s32.totalorder %v297, 0
      %v299 = vsel %vm298, %v297, 0
      %v300 = vshrl.u32 %v299, 5
      %v301 = vand.u32 %v299, 31
      %v302 = vsub.s32 32, %v301
      %v303 = vshrl.u32 683565275, %v302
      %v304 = vshll.u32 683565275, %v301
      %v305 = vshrl.u32 2475754826, %v302
      %v306 = vor.u32 %v304, %v305
      %v307 = vshll.u32 2475754826, %v301
      %v308 = vshrl.u32 2131351028, %v302
      %v309 = vor.u32 %v307, %v308
      %v310 = vshll.u32 2131351028, %v301
      %v311 = vshrl.u32 2102212464, %v302
      %v312 = vor.u32 %v310, %v311
      %v313 = vshll.u32 2102212464, %v301
      %v314 = vshrl.u32 920167782, %v302
      %v315 = vor.u32 %v313, %v314
      %v316 = vshll.u32 920167782, %v301
      %v317 = vshrl.u32 1326507024, %v302
      %v318 = vor.u32 %v316, %v317
      %vm319 = vcmp.lt.s32.totalorder %v300, 1
      %vm320 = vcmp.lt.s32.totalorder %v300, 2
      %vm321 = vcmp.lt.s32.totalorder %v300, 3
      %vm322 = vcmp.lt.s32.totalorder %v300, 4
      %v323 = vsel %vm319, %v303, %v306
      %v324 = vsel %vm322, %v312, 2102212464
      %v325 = vsel %vm321, %v309, %v324
      %v326 = vsel %vm320, %v323, %v325
      %v327 = vsel %vm319, %v306, %v309
      %v328 = vsel %vm322, %v315, 920167782
      %v329 = vsel %vm321, %v312, %v328
      %v330 = vsel %vm320, %v327, %v329
      %v331 = vsel %vm319, %v309, %v312
      %v332 = vsel %vm322, %v318, 1326507024
      %v333 = vsel %vm321, %v315, %v332
      %v334 = vsel %vm320, %v331, %v333
      %v335 = vshll.u32 %v295, 8
      %v336 = vmul.u32.u64.compose %v335, %v334
      %v337 = vextract.low.u32 %v336
      %v338 = vextract.high.u32 %v336
      %v339 = vmul.u32.u64.compose %v335, %v330
      %v340 = vextract.low.u32 %v339
      %v341 = vextract.high.u32 %v339
      %v342 = vmul.u32 %v335, %v326
      %v343 = vadd.s32 %v338, %v340
      %vm344 = vc.u32 %v338, %v340
      %v345 = vadd.s32 %v341, 1
      %v346 = vsel %vm344, %v345, %v341
      %v347 = vadd.s32 %v342, %v346
      %v348 = vadd.s32 %v347, 536870912
      %v349 = vshrl.u32 %v348, 30
      %v350 = vshll.u32 %v349, 30
      %v351 = vsub.s32 %v347, %v350
      %vm352 = vcmp.lt.s32.totalorder %v351, 0
      %v353 = vsub.s32 0, %v351
      %v354 = vsel %vm352, %v353, %v351
      %v355 = vclz %v354
      %v356 = vsub.s32 %v355, 2
      %vm357 = vcmp.gt.s32.totalorder 0, %v356
      %v358 = vsel %vm357, 0, %v356
      %v359 = vsub.s32 32, %v358
      %v360 = vshll.u32 %v351, %v358
      %v361 = vshrl.u32 %v343, %v359
      %v362 = vor.u32 %v360, %v361
      %v363 = vsub.s32 4294967266, %v358
      %v364 = vadd.s32 %v363, 127
      %v365 = vshll.u32 %v364, 23
      %v366 = vor.u32 4788187, %v365
      %v367 = vand.u32 2147483647, %v366
      %v369 = vcvt.s32.f32 %v362
      %v370 = vmul.f32 %v369, %v367
      %v371 = vxor.u32 %v370, 2147483648
      %v372 = vsel %vm289, %v371, %v370
      %v373 = vsub.s32 4, %v349
      %v374 = vsel %vm289, %v373, %v349
      %v375 = vsel %vm288, %v266, %v372
      %v376 = vsel %vm288, 0, %v374
      %v377 = vcosq.f32.pop %v375
      %v378 = vsinq.f32.pop %v375
      %vm379 = vweird.f32 %v266
      %v380 = vadd.s32 %v376, 3
      %v381 = vand.u32 %v380, 3
      %vm382 = vcmp.lt.s32.totalorder %v381, 2
      %vm383 = vcmp.eq.s32.totalorder %v381, 0
      %v384 = vxor.u32 %v378, 2147483648
      %v385 = vsel %vm383, %v377, %v384
      %vm386 = vcmp.eq.s32.totalorder %v381, 2
      %v387 = vxor.u32 %v377, 2147483648
      %v388 = vsel %vm386, %v387, %v378
      %v389 = vsel %vm382, %v385, %v388
      %v390 = vsel %vm379, nan, %v389
      %v391 = vand.u32 2147483647, %v271
      %vm392 = vcmp.le.f32.partialorder %v391, 0.7853982
      %vm393 = vcmp.lt.s32.totalorder %v271, 0
      %v394 = vand.u32 %v271, 2139095040
      %v395 = vshrl.u32 %v394, 23
      %v396 = vsub.s32 %v395, 127
      %v397 = vand.u32 2147483647, %v271
      %v398 = vand.u32 %v397, 8388607
      %v399 = vor.u32 %v398, 8388608
      %v400 = vsub.s32 0, %v399
      %v401 = vadd.s32 %v396, 1
      %vm402 = vcmp.gt.s32.totalorder %v401, 0
      %v403 = vsel %vm402, %v401, 0
      %v404 = vshrl.u32 %v403, 5
      %v405 = vand.u32 %v403, 31
      %v406 = vsub.s32 32, %v405
      %v407 = vshrl.u32 683565275, %v406
      %v408 = vshll.u32 683565275, %v405
      %v409 = vshrl.u32 2475754826, %v406
      %v410 = vor.u32 %v408, %v409
      %v411 = vshll.u32 2475754826, %v405
      %v412 = vshrl.u32 2131351028, %v406
      %v413 = vor.u32 %v411, %v412
      %v414 = vshll.u32 2131351028, %v405
      %v415 = vshrl.u32 2102212464, %v406
      %v416 = vor.u32 %v414, %v415
      %v417 = vshll.u32 2102212464, %v405
      %v418 = vshrl.u32 920167782, %v406
      %v419 = vor.u32 %v417, %v418
      %v420 = vshll.u32 920167782, %v405
      %v421 = vshrl.u32 1326507024, %v406
      %v422 = vor.u32 %v420, %v421
      %vm423 = vcmp.lt.s32.totalorder %v404, 1
      %vm424 = vcmp.lt.s32.totalorder %v404, 2
      %vm425 = vcmp.lt.s32.totalorder %v404, 3
      %vm426 = vcmp.lt.s32.totalorder %v404, 4
      %v427 = vsel %vm423, %v407, %v410
      %v428 = vsel %vm426, %v416, 2102212464
      %v429 = vsel %vm425, %v413, %v428
      %v430 = vsel %vm424, %v427, %v429
      %v431 = vsel %vm423, %v410, %v413
      %v432 = vsel %vm426, %v419, 920167782
      %v433 = vsel %vm425, %v416, %v432
      %v434 = vsel %vm424, %v431, %v433
      %v435 = vsel %vm423, %v413, %v416
      %v436 = vsel %vm426, %v422, 1326507024
      %v437 = vsel %vm425, %v419, %v436
      %v438 = vsel %vm424, %v435, %v437
      %v439 = vshll.u32 %v399, 8
      %v440 = vmul.u32.u64.compose %v439, %v438
      %v441 = vextract.low.u32 %v440
      %v442 = vextract.high.u32 %v440
      %v443 = vmul.u32.u64.compose %v439, %v434
      %v444 = vextract.low.u32 %v443
      %v445 = vextract.high.u32 %v443
      %v446 = vmul.u32 %v439, %v430
      %v447 = vadd.s32 %v442, %v444
      %vm448 = vc.u32 %v442, %v444
      %v449 = vadd.s32 %v445, 1
      %v450 = vsel %vm448, %v449, %v445
      %v451 = vadd.s32 %v446, %v450
      %v452 = vadd.s32 %v451, 536870912
      %v453 = vshrl.u32 %v452, 30
      %v454 = vshll.u32 %v453, 30
      %v455 = vsub.s32 %v451, %v454
      %vm456 = vcmp.lt.s32.totalorder %v455, 0
      %v457 = vsub.s32 0, %v455
      %v458 = vsel %vm456, %v457, %v455
      %v459 = vclz %v458
      %v460 = vsub.s32 %v459, 2
      %vm461 = vcmp.gt.s32.totalorder 0, %v460
      %v462 = vsel %vm461, 0, %v460
      %v463 = vsub.s32 32, %v462
      %v464 = vshll.u32 %v455, %v462
      %v465 = vshrl.u32 %v447, %v463
      %v466 = vor.u32 %v464, %v465
      %v467 = vsub.s32 4294967266, %v462
      %v468 = vadd.s32 %v467, 127
      %v469 = vshll.u32 %v468, 23
      %v470 = vor.u32 4788187, %v469
      %v471 = vand.u32 2147483647, %v470
      %v473 = vcvt.s32.f32 %v466
      %v474 = vmul.f32 %v473, %v471
      %v475 = vxor.u32 %v474, 2147483648
      %v476 = vsel %vm393, %v475, %v474
      %v477 = vsub.s32 4, %v453
      %v478 = vsel %vm393, %v477, %v453
      %v479 = vsel %vm392, %v271, %v476
      %v480 = vsel %vm392, 0, %v478
      %v481 = vcosq.f32.pop %v479
      %v482 = vsinq.f32.pop %v479
      %vm483 = vweird.f32 %v271
      %v484 = vadd.s32 %v480, 3
      %v485 = vand.u32 %v484, 3
      %vm486 = vcmp.lt.s32.totalorder %v485, 2
      %vm487 = vcmp.eq.s32.totalorder %v485, 0
      %v488 = vxor.u32 %v482, 2147483648
      %v489 = vsel %vm487, %v481, %v488
      %vm490 = vcmp.eq.s32.totalorder %v485, 2
      %v491 = vxor.u32 %v481, 2147483648
      %v492 = vsel %vm490, %v491, %v482
      %v493 = vsel %vm486, %v489, %v492
      %v494 = vsel %vm483, nan, %v493
      %v495 = vand.u32 2147483647, %v276
      %vm496 = vcmp.le.f32.partialorder %v495, 0.7853982
      %vm497 = vcmp.lt.s32.totalorder %v276, 0
      %v498 = vand.u32 %v276, 2139095040
      %v499 = vshrl.u32 %v498, 23
      %v500 = vsub.s32 %v499, 127
      %v501 = vand.u32 2147483647, %v276
      %v502 = vand.u32 %v501, 8388607
      %v503 = vor.u32 %v502, 8388608
      %v504 = vsub.s32 0, %v503
      %v505 = vadd.s32 %v500, 1
      %vm506 = vcmp.gt.s32.totalorder %v505, 0
      %v507 = vsel %vm506, %v505, 0
      %v508 = vshrl.u32 %v507, 5
      %v509 = vand.u32 %v507, 31
      %v510 = vsub.s32 32, %v509
      %v511 = vshrl.u32 683565275, %v510
      %v512 = vshll.u32 683565275, %v509
      %v513 = vshrl.u32 2475754826, %v510
      %v514 = vor.u32 %v512, %v513
      %v515 = vshll.u32 2475754826, %v509
      %v516 = vshrl.u32 2131351028, %v510
      %v517 = vor.u32 %v515, %v516
      %v518 = vshll.u32 2131351028, %v509
      %v519 = vshrl.u32 2102212464, %v510
      %v520 = vor.u32 %v518, %v519
      %v521 = vshll.u32 2102212464, %v509
      %v522 = vshrl.u32 920167782, %v510
      %v523 = vor.u32 %v521, %v522
      %v524 = vshll.u32 920167782, %v509
      %v525 = vshrl.u32 1326507024, %v510
      %v526 = vor.u32 %v524, %v525
      %vm527 = vcmp.lt.s32.totalorder %v508, 1
      %vm528 = vcmp.lt.s32.totalorder %v508, 2
      %vm529 = vcmp.lt.s32.totalorder %v508, 3
      %vm530 = vcmp.lt.s32.totalorder %v508, 4
      %v531 = vsel %vm527, %v511, %v514
      %v532 = vsel %vm530, %v520, 2102212464
      %v533 = vsel %vm529, %v517, %v532
      %v534 = vsel %vm528, %v531, %v533
      %v535 = vsel %vm527, %v514, %v517
      %v536 = vsel %vm530, %v523, 920167782
      %v537 = vsel %vm529, %v520, %v536
      %v538 = vsel %vm528, %v535, %v537
      %v539 = vsel %vm527, %v517, %v520
      %v540 = vsel %vm530, %v526, 1326507024
      %v541 = vsel %vm529, %v523, %v540
      %v542 = vsel %vm528, %v539, %v541
      %v543 = vshll.u32 %v503, 8
      %v544 = vmul.u32.u64.compose %v543, %v542
      %v545 = vextract.low.u32 %v544
      %v546 = vextract.high.u32 %v544
      %v547 = vmul.u32.u64.compose %v543, %v538
      %v548 = vextract.low.u32 %v547
      %v549 = vextract.high.u32 %v547
      %v550 = vmul.u32 %v543, %v534
      %v551 = vadd.s32 %v546, %v548
      %vm552 = vc.u32 %v546, %v548
      %v553 = vadd.s32 %v549, 1
      %v554 = vsel %vm552, %v553, %v549
      %v555 = vadd.s32 %v550, %v554
      %v556 = vadd.s32 %v555, 536870912
      %v557 = vshrl.u32 %v556, 30
      %v558 = vshll.u32 %v557, 30
      %v559 = vsub.s32 %v555, %v558
      %vm560 = vcmp.lt.s32.totalorder %v559, 0
      %v561 = vsub.s32 0, %v559
      %v562 = vsel %vm560, %v561, %v559
      %v563 = vclz %v562
      %v564 = vsub.s32 %v563, 2
      %vm565 = vcmp.gt.s32.totalorder 0, %v564
      %v566 = vsel %vm565, 0, %v564
      %v567 = vsub.s32 32, %v566
      %v568 = vshll.u32 %v559, %v566
      %v569 = vshrl.u32 %v551, %v567
      %v570 = vor.u32 %v568, %v569
      %v571 = vsub.s32 4294967266, %v566
      %v572 = vadd.s32 %v571, 127
      %v573 = vshll.u32 %v572, 23
      %v574 = vor.u32 4788187, %v573
      %v575 = vand.u32 2147483647, %v574
      %v577 = vcvt.s32.f32 %v570
      %v578 = vmul.f32 %v577, %v575
      %v579 = vxor.u32 %v578, 2147483648
      %v580 = vsel %vm497, %v579, %v578
      %v581 = vsub.s32 4, %v557
      %v582 = vsel %vm497, %v581, %v557
      %v583 = vsel %vm496, %v276, %v580
      %v584 = vsel %vm496, 0, %v582
      %v585 = vcosq.f32.pop %v583
      %v586 = vsinq.f32.pop %v583
      %vm587 = vweird.f32 %v276
      %v588 = vadd.s32 %v584, 3
      %v589 = vand.u32 %v588, 3
      %vm590 = vcmp.lt.s32.totalorder %v589, 2
      %vm591 = vcmp.eq.s32.totalorder %v589, 0
      %v592 = vxor.u32 %v586, 2147483648
      %v593 = vsel %vm591, %v585, %v592
      %vm594 = vcmp.eq.s32.totalorder %v589, 2
      %v595 = vxor.u32 %v585, 2147483648
      %v596 = vsel %vm594, %v595, %v586
      %v597 = vsel %vm590, %v593, %v596
      %v598 = vsel %vm587, nan, %v597
      %v599 = vand.u32 2147483647, %v281
      %vm600 = vcmp.le.f32.partialorder %v599, 0.7853982
      %vm601 = vcmp.lt.s32.totalorder %v281, 0
      %v602 = vand.u32 %v281, 2139095040
      %v603 = vshrl.u32 %v602, 23
      %v604 = vsub.s32 %v603, 127
      %v605 = vand.u32 2147483647, %v281
      %v606 = vand.u32 %v605, 8388607
      %v607 = vor.u32 %v606, 8388608
      %v608 = vsub.s32 0, %v607
      %v609 = vadd.s32 %v604, 1
      %vm610 = vcmp.gt.s32.totalorder %v609, 0
      %v611 = vsel %vm610, %v609, 0
      %v612 = vshrl.u32 %v611, 5
      %v613 = vand.u32 %v611, 31
      %v614 = vsub.s32 32, %v613
      %v615 = vshrl.u32 683565275, %v614
      %v616 = vshll.u32 683565275, %v613
      %v617 = vshrl.u32 2475754826, %v614
      %v618 = vor.u32 %v616, %v617
      %v619 = vshll.u32 2475754826, %v613
      %v620 = vshrl.u32 2131351028, %v614
      %v621 = vor.u32 %v619, %v620
      %v622 = vshll.u32 2131351028, %v613
      %v623 = vshrl.u32 2102212464, %v614
      %v624 = vor.u32 %v622, %v623
      %v625 = vshll.u32 2102212464, %v613
      %v626 = vshrl.u32 920167782, %v614
      %v627 = vor.u32 %v625, %v626
      %v628 = vshll.u32 920167782, %v613
      %v629 = vshrl.u32 1326507024, %v614
      %v630 = vor.u32 %v628, %v629
      %vm631 = vcmp.lt.s32.totalorder %v612, 1
      %vm632 = vcmp.lt.s32.totalorder %v612, 2
      %vm633 = vcmp.lt.s32.totalorder %v612, 3
      %vm634 = vcmp.lt.s32.totalorder %v612, 4
      %v635 = vsel %vm631, %v615, %v618
      %v636 = vsel %vm634, %v624, 2102212464
      %v637 = vsel %vm633, %v621, %v636
      %v638 = vsel %vm632, %v635, %v637
      %v639 = vsel %vm631, %v618, %v621
      %v640 = vsel %vm634, %v627, 920167782
      %v641 = vsel %vm633, %v624, %v640
      %v642 = vsel %vm632, %v639, %v641
      %v643 = vsel %vm631, %v621, %v624
      %v644 = vsel %vm634, %v630, 1326507024
      %v645 = vsel %vm633, %v627, %v644
      %v646 = vsel %vm632, %v643, %v645
      %v647 = vshll.u32 %v607, 8
      %v648 = vmul.u32.u64.compose %v647, %v646
      %v649 = vextract.low.u32 %v648
      %v650 = vextract.high.u32 %v648
      %v651 = vmul.u32.u64.compose %v647, %v642
      %v652 = vextract.low.u32 %v651
      %v653 = vextract.high.u32 %v651
      %v654 = vmul.u32 %v647, %v638
      %v655 = vadd.s32 %v650, %v652
      %vm656 = vc.u32 %v650, %v652
      %v657 = vadd.s32 %v653, 1
      %v658 = vsel %vm656, %v657, %v653
      %v659 = vadd.s32 %v654, %v658
      %v660 = vadd.s32 %v659, 536870912
      %v661 = vshrl.u32 %v660, 30
      %v662 = vshll.u32 %v661, 30
      %v663 = vsub.s32 %v659, %v662
      %vm664 = vcmp.lt.s32.totalorder %v663, 0
      %v665 = vsub.s32 0, %v663
      %v666 = vsel %vm664, %v665, %v663
      %v667 = vclz %v666
      %v668 = vsub.s32 %v667, 2
      %vm669 = vcmp.gt.s32.totalorder 0, %v668
      %v670 = vsel %vm669, 0, %v668
      %v671 = vsub.s32 32, %v670
      %v672 = vshll.u32 %v663, %v670
      %v673 = vshrl.u32 %v655, %v671
      %v674 = vor.u32 %v672, %v673
      %v675 = vsub.s32 4294967266, %v670
      %v676 = vadd.s32 %v675, 127
      %v677 = vshll.u32 %v676, 23
      %v678 = vor.u32 4788187, %v677
      %v679 = vand.u32 2147483647, %v678
      %v681 = vcvt.s32.f32 %v674
      %v682 = vmul.f32 %v681, %v679
      %v683 = vxor.u32 %v682, 2147483648
      %v684 = vsel %vm601, %v683, %v682
      %v685 = vsub.s32 4, %v661
      %v686 = vsel %vm601, %v685, %v661
      %v687 = vsel %vm600, %v281, %v684
      %v688 = vsel %vm600, 0, %v686
      %v689 = vcosq.f32.pop %v687
      %v690 = vsinq.f32.pop %v687
      %vm691 = vweird.f32 %v281
      %v692 = vadd.s32 %v688, 3
      %v693 = vand.u32 %v692, 3
      %vm694 = vcmp.lt.s32.totalorder %v693, 2
      %vm695 = vcmp.eq.s32.totalorder %v693, 0
      %v696 = vxor.u32 %v690, 2147483648
      %v697 = vsel %vm695, %v689, %v696
      %vm698 = vcmp.eq.s32.totalorder %v693, 2
      %v699 = vxor.u32 %v689, 2147483648
      %v700 = vsel %vm698, %v699, %v690
      %v701 = vsel %vm694, %v697, %v700
      %v702 = vsel %vm691, nan, %v701
      %v703 = vsel %vm286, %v390, %v266
      %v704 = vsel %vm286, %v494, %v271
      %v705 = vsel %vm286, %v598, %v276
      %v706 = vsel %vm286, %v702, %v281
      %vm707 = vcmask 261120
      %708 = vst.msk [vmem:[%s172] sm:$0xff] %vm707, %v703
      %709 = vst.msk [vmem:[%s172 + $0x8] sm:$0xff] %vm707, %v704
      %710 = vst.msk [vmem:[%s172 + $0x10] sm:$0xff] %vm707, %v705
      %711 = vst.msk [vmem:[%s172 + $0x18] sm:$0xff] %vm707, %v706
      %s712 = smul.u32 4, %s14
      %p713 = scmp.lt.s32.totalorder %s712, 7
      %s714 = scalar_select %p713, %s712, 7
      %s715 = smul.addr %s714, 8
      %s716 = scalar_lea.vmem %s3, %s715
      // Predicated region
      $region33: #{tpu_custom_call.1} parent=31 // pred_check
        %p717 = pneg %p100
      $region34: #{tpu_custom_call.1} parent=31 // pred_check_branch
        %719 = sbr.rel (%p717) target = $region36
      $region35: #{tpu_custom_call.1} parent=31 // pred_region
        %s720 = smul.u32 4, %s14
      $region36: #{tpu_custom_call.1} parent=31 // pred_fallthru
        _
    $region32: #{tpu_custom_call.1} parent=5 // pred_fallthru
      _
    %p721 = scmp.le.s32.totalorder 2, %s9
    // Predicated region
    $region37: #{tpu_custom_call.1} parent=5 // pred_check
      %p722 = pneg %p721
    $region38: #{tpu_custom_call.1} parent=5 // pred_check_branch
      %724 = sbr.rel (%p722) target = $region40
    $region39: #{tpu_custom_call.1} parent=5 // pred_region
      %s725 = ssub.s32 %s9, 2
      // Predicated region
      $region41: #{tpu_custom_call.1} parent=39 // pred_check
        %p726 = pneg %p106
      $region42: #{tpu_custom_call.1} parent=39 // pred_check_branch
        %728 = sbr.rel (%p726) target = $region44
      $region43: #{tpu_custom_call.1} parent=39 // pred_region
        %s729 = smul.u32 4, %s15
        %p730 = scmp.lt.s32.totalorder %s729, 7
        %s731 = scalar_select %p730, %s729, 7
        %s732 = smul.addr %s731, 8
        %s733 = scalar_lea.vmem %s3, %s732
      $region44: #{tpu_custom_call.1} parent=39 // pred_fallthru
        _
    $region40: #{tpu_custom_call.1} parent=5 // pred_fallthru
      _
  $region6: #{tpu_custom_call.1} parent=0 // loop_footer
    %s13 = sadd.s32 1, %s9
  $region7: #{tpu_custom_call.1} parent=0 // loop_footer_branch
    %8 = sbr.rel target = $region3
  $region8: #{tpu_custom_call.1} parent=0 // loop_exit
    _

</llo_original>
